<compile_context>
chip_gen: v6e
topology: v6e:2x2x1
jax: 0.10.0
libtpu: 0.0.40
codegen_flags: <defaults>
</compile_context>

<pallas_src>
import math
import functools

import jax
import jax.numpy as jnp
from jax.experimental import pallas as pl
from jax.experimental.pallas import tpu as pltpu


def _gaussian_taps_1d(kernel_size: int, sigma: float):
    """Normalized 1-D gaussian taps as Python floats (trace-time constants).

    Reproduces the (slightly nonstandard) torch construction:
        g(x) = exp(-((x - mean) / (2*sigma))**2),  mean = (K-1)/2
    The module's 2-D kernel is outer(g, g) / sum(outer(g, g)), which equals
    outer(gn, gn) with gn = g / sum(g) -- i.e. exactly separable.
    """
    mean = (kernel_size - 1) / 2.0
    g = [math.exp(-(((i - mean) / (2.0 * sigma)) ** 2)) for i in range(kernel_size)]
    s = sum(g)
    return tuple(v / s for v in g)


def _smoothing_kernel(x_ref, o_ref, *, H: int, W: int, pad: int, taps, sub: int):
    # x_ref / o_ref : (Pb, L) with L = H*W on the lane axis.
    # Each sublane row is one independent (batch, channel) plane, flattened
    # row-major: flat index f = h*W + w.
    Pb, L = o_ref.shape
    nsub = Pb // sub

    # Lane-position helpers, hoisted out of the strip loop (JAX does not CSE
    # broadcast/iota, so build them exactly once per grid step).
    lane = jax.lax.broadcasted_iota(jnp.int32, (sub, L), 1)   # f = h*W + w
    col = lane % W                                            # w = f mod W

    def strip(i, carry):
        off = pl.multiple_of(i * sub, sub)
        x = x_ref[pl.ds(off, sub), :].astype(jnp.float32)

        # ---- H pass: th[f] = sum_dy taps[pad+dy] * x[f + dy*W], zero-padded.
        # Row shifts are lane rolls by multiples of W; the masks zero exactly
        # the wrapped-around rows (== the conv's zero padding).
        th = taps[pad] * x
        for dy in range(1, pad + 1):
            s = (dy * W) % L
            dn = pltpu.roll(x, (L - s) % L, axis=1)            # x[f + dy*W]
            dn = jnp.where(lane < (H - dy) * W, dn, 0.0)
            up = pltpu.roll(x, s, axis=1)                      # x[f - dy*W]
            up = jnp.where(lane >= dy * W, up, 0.0)
            th = th + taps[pad + dy] * dn + taps[pad - dy] * up

        # ---- W pass: out[f] = sum_dx taps[pad+dx] * th[f + dx], zero-padded.
        acc = taps[pad] * th
        for dx in range(1, pad + 1):
            rt = pltpu.roll(th, (L - dx) % L, axis=1)          # th[f + dx]
            rt = jnp.where(col < W - dx, rt, 0.0)
            lf = pltpu.roll(th, dx % L, axis=1)                # th[f - dx]
            lf = jnp.where(col >= dx, lf, 0.0)
            acc = acc + taps[pad + dx] * rt + taps[pad - dx] * lf

        o_ref[pl.ds(off, sub), :] = acc.astype(o_ref.dtype)
        return carry

    # Strip loop bounds register live ranges (whole-block values would spill
    # once blocks grow); unrolled when short so the LLO scheduler sees it.
    jax.lax.fori_loop(0, nsub, strip, 0, unroll=nsub <= 8)


def gaussian_smoothing(x, channels: int, kernel_size: int, sigma: float):
    """Pallas equivalent of GaussianSmoothing(channels, kernel_size, sigma, dim=2)(x)."""
    N, C, H, W = x.shape
    assert C == channels
    K = int(kernel_size)
    # Odd K gives 'same'-shaped output (matches F.conv2d with padding=K//2).
    assert K % 2 == 1, "kernel_size must be odd for same-shape output"
    pad = K // 2
    taps = _gaussian_taps_1d(K, sigma)

    # Depthwise conv is independent per (batch, channel) plane -> fold them,
    # and flatten each plane onto the lane axis (lane-dense loads/stores).
    P = N * C
    L = H * W
    x2 = x.reshape(P, L)                      # free reshape (contiguous)

    # ---- block sizing, gated on the actual chip's VMEM capacity -----------
    try:
        vmem_cap = int(pltpu.get_tpu_info().vmem_capacity_bytes)
    except Exception:                          # conservative (v7x-sized) fallback
        vmem_cap = 64 * 1024 * 1024
    elt = jnp.dtype(x.dtype).itemsize
    per_plane = L * (2 * elt + 2 * elt)        # 2x in + 2x out (double-buffered)
    budget = min(24 * 1024 * 1024, vmem_cap // 6)        # ~21 MiB v5e/v6e, ~10 MiB v7x
    vmem_limit = int(min(64 * 1024 * 1024, (vmem_cap * 3) // 4))

    Pb = max(1, min(P, budget // max(per_plane, 1)))
    if P > 8:
        Pb = max(8, (Pb // 8) * 8)             # sublane-aligned blocks
        if P >= 32:
            # keep >= 4 grid steps so both TensorCores of a 2-TC part (v7x)
            # get balanced work; blocks stay large enough that the extra
            # per-step overhead is negligible on 1-TC parts.
            quarter = max(8, ((pl.cdiv(P, 4) + 7) // 8) * 8)
            Pb = min(Pb, quarter)
    else:
        Pb = P                                  # single full-extent block
    sub = Pb if Pb < 8 else 8                  # strip size; Pb % sub == 0
    grid = (pl.cdiv(P, Pb),)
    # TODO(synk): very large single planes (a sub*L f32 strip far beyond the
    # vreg file) would additionally need lane-axis tiling with a (K-1) halo.

    kernel = functools.partial(
        _smoothing_kernel, H=H, W=W, pad=pad, taps=taps, sub=sub)
    out2 = pl.pallas_call(
        kernel,
        out_shape=jax.ShapeDtypeStruct((P, L), x.dtype),
        grid=grid,
        in_specs=[pl.BlockSpec((Pb, L), lambda i: (i, 0))],
        out_specs=pl.BlockSpec((Pb, L), lambda i: (i, 0)),
        compiler_params=pltpu.CompilerParams(
            dimension_semantics=("parallel",),
            vmem_limit_bytes=vmem_limit,
        ),
    )(x2)
    return out2.reshape(N, C, H, W)


if __name__ == "__main__":
    channels, kernel_size, sigma = 4, 3, 1.0
    N, C, H, W = 2, channels, 16, 16

    key = jax.random.PRNGKey(0)
    x = jax.random.normal(key, (N, C, H, W), dtype=jnp.float32)

    out = gaussian_smoothing(x, channels, kernel_size, sigma)
    out = jax.block_until_ready(out)

    # Reference: depthwise conv (same semantics as F.conv2d groups=C) with the
    # torch-style f32 kernel construction.
    coords = jnp.arange(kernel_size, dtype=jnp.float32)
    mean = (kernel_size - 1) / 2.0
    g1d = (1.0 / (sigma * math.sqrt(2.0 * math.pi))) * jnp.exp(
        -(((coords - mean) / (2.0 * sigma)) ** 2))
    k2d = jnp.outer(g1d, g1d)
    k2d = k2d / jnp.sum(k2d)
    w = jnp.tile(k2d[None, None], (C, 1, 1, 1))
    pad = kernel_size // 2
    ref = jax.lax.conv_general_dilated(
        x, w, window_strides=(1, 1),
        padding=[(pad, pad), (pad, pad)],
        dimension_numbers=("NCHW", "OIHW", "NCHW"),
        feature_group_count=C,
        precision=jax.lax.Precision.HIGHEST)

    assert out.shape == ref.shape, (out.shape, ref.shape)
    err = float(jnp.max(jnp.abs(out - ref)))
    assert err < 1e-5, err
    print("KERNEL_OK")
</pallas_src>

<mosaic_0001>
module attributes {stable_mosaic.version = 11 : i64} {
  func.func @_smoothing_kernel(%arg0: i32, %arg1: memref<8x256xf32, #tpu.memory_space<vmem>>, %arg2: memref<8x256xf32, #tpu.memory_space<vmem>>) attributes {dimension_semantics = [#tpu.dimension_semantics<parallel>], iteration_bounds = array<i64: 1>, scalar_prefetch = 0 : i64, scratch_operands = 0 : i64, tpu.core_type = #tpu.core_type<tc>, window_params = [{transform_indices = @transform_0, window_bounds = array<i64: 8, 256>}, {transform_indices = @transform_1, window_bounds = array<i64: 8, 256>}]} {
    %0 = tpu.iota {dimensions = array<i32: 1>} : vector<8x256xi32>
    %c16_i32 = arith.constant 16 : i32
    %c0_i32 = arith.constant 0 : i32
    %1 = arith.cmpi eq, %c16_i32, %c0_i32 : i32
    %c1_i32 = arith.constant 1 : i32
    %2 = arith.select %1, %c1_i32, %c16_i32 : i32
    %3 = vector.broadcast %2 : i32 to vector<8x256xi32>
    %4 = arith.remsi %0, %3 : vector<8x256xi32>
    %c0_i32_0 = arith.constant 0 : i32
    %5 = vector.broadcast %c0_i32_0 : i32 to vector<8x256xi32>
    %6 = arith.cmpi ne, %4, %5 : vector<8x256xi32>
    %c0_i32_1 = arith.constant 0 : i32
    %7 = vector.broadcast %c0_i32_1 : i32 to vector<8x256xi32>
    %8 = arith.cmpi slt, %4, %7 : vector<8x256xi32>
    %c0_i32_2 = arith.constant 0 : i32
    %9 = arith.cmpi slt, %2, %c0_i32_2 : i32
    %10 = vector.broadcast %9 : i1 to vector<8x256xi1>
    %11 = vector.broadcast %10 : vector<8x256xi1> to vector<8x256xi1>
    %12 = arith.xori %8, %11 : vector<8x256xi1>
    %13 = arith.andi %12, %6 : vector<8x256xi1>
    %14 = vector.broadcast %2 : i32 to vector<8x256xi32>
    %15 = arith.addi %4, %14 : vector<8x256xi32>
    %16 = arith.select %13, %15, %4 : vector<8x256xi1>, vector<8x256xi32>
    %c0_i32_3 = arith.constant 0 : i32
    %c8_i32 = arith.constant 8 : i32
    %17 = arith.muli %c0_i32_3, %c8_i32 : i32
    %18 = tpu.assume_multiple %17, 8 : i32
    %19 = arith.index_cast %18 : i32 to index
    %c0 = arith.constant 0 : index
    %20 = vector.load %arg1[%19, %c0] : memref<8x256xf32, #tpu.memory_space<vmem>>, vector<8x256xf32>
    %cst = arith.constant 0.3909913 : f32
    %21 = vector.broadcast %cst : f32 to vector<8x256xf32>
    %22 = arith.mulf %21, %20 : vector<8x256xf32>
    %c240_i32 = arith.constant 240 : i32
    %23 = tpu.dynamic_rotate %20 by %c240_i32 dim 1 : vector<8x256xf32>, i32 -> vector<8x256xf32>
    %c240_i32_4 = arith.constant 240 : i32
    %24 = vector.broadcast %c240_i32_4 : i32 to vector<8x256xi32>
    %25 = arith.cmpi slt, %0, %24 : vector<8x256xi32>
    %cst_5 = arith.constant 0.000000e+00 : f32
    %26 = vector.broadcast %cst_5 : f32 to vector<8x256xf32>
    %27 = arith.select %25, %23, %26 : vector<8x256xi1>, vector<8x256xf32>
    %c16_i32_6 = arith.constant 16 : i32
    %28 = tpu.dynamic_rotate %20 by %c16_i32_6 dim 1 : vector<8x256xf32>, i32 -> vector<8x256xf32>
    %c16_i32_7 = arith.constant 16 : i32
    %29 = vector.broadcast %c16_i32_7 : i32 to vector<8x256xi32>
    %30 = arith.cmpi sge, %0, %29 : vector<8x256xi32>
    %cst_8 = arith.constant 0.000000e+00 : f32
    %31 = vector.broadcast %cst_8 : f32 to vector<8x256xf32>
    %32 = arith.select %30, %28, %31 : vector<8x256xi1>, vector<8x256xf32>
    %cst_9 = arith.constant 0.304504335 : f32
    %33 = vector.broadcast %cst_9 : f32 to vector<8x256xf32>
    %34 = arith.mulf %33, %27 : vector<8x256xf32>
    %35 = arith.addf %22, %34 : vector<8x256xf32>
    %cst_10 = arith.constant 0.304504335 : f32
    %36 = vector.broadcast %cst_10 : f32 to vector<8x256xf32>
    %37 = arith.mulf %36, %32 : vector<8x256xf32>
    %38 = arith.addf %35, %37 : vector<8x256xf32>
    %cst_11 = arith.constant 0.3909913 : f32
    %39 = vector.broadcast %cst_11 : f32 to vector<8x256xf32>
    %40 = arith.mulf %39, %38 : vector<8x256xf32>
    %c255_i32 = arith.constant 255 : i32
    %41 = tpu.dynamic_rotate %38 by %c255_i32 dim 1 : vector<8x256xf32>, i32 -> vector<8x256xf32>
    %c15_i32 = arith.constant 15 : i32
    %42 = vector.broadcast %c15_i32 : i32 to vector<8x256xi32>
    %43 = arith.cmpi slt, %16, %42 : vector<8x256xi32>
    %cst_12 = arith.constant 0.000000e+00 : f32
    %44 = vector.broadcast %cst_12 : f32 to vector<8x256xf32>
    %45 = arith.select %43, %41, %44 : vector<8x256xi1>, vector<8x256xf32>
    %c1_i32_13 = arith.constant 1 : i32
    %46 = tpu.dynamic_rotate %38 by %c1_i32_13 dim 1 : vector<8x256xf32>, i32 -> vector<8x256xf32>
    %c1_i32_14 = arith.constant 1 : i32
    %47 = vector.broadcast %c1_i32_14 : i32 to vector<8x256xi32>
    %48 = arith.cmpi sge, %16, %47 : vector<8x256xi32>
    %cst_15 = arith.constant 0.000000e+00 : f32
    %49 = vector.broadcast %cst_15 : f32 to vector<8x256xf32>
    %50 = arith.select %48, %46, %49 : vector<8x256xi1>, vector<8x256xf32>
    %cst_16 = arith.constant 0.304504335 : f32
    %51 = vector.broadcast %cst_16 : f32 to vector<8x256xf32>
    %52 = arith.mulf %51, %45 : vector<8x256xf32>
    %53 = arith.addf %40, %52 : vector<8x256xf32>
    %cst_17 = arith.constant 0.304504335 : f32
    %54 = vector.broadcast %cst_17 : f32 to vector<8x256xf32>
    %55 = arith.mulf %54, %50 : vector<8x256xf32>
    %56 = arith.addf %53, %55 : vector<8x256xf32>
    %57 = arith.index_cast %18 : i32 to index
    %c0_18 = arith.constant 0 : index
    %58 = vector.load %arg2[%57, %c0_18] : memref<8x256xf32, #tpu.memory_space<vmem>>, vector<8x256xf32>
    tpu.vector_store %arg2[%57, %c0_18], %56 {strides = array<i32>} : memref<8x256xf32, #tpu.memory_space<vmem>>, vector<8x256xf32>,
    %c1_i32_19 = arith.constant 1 : i32
    return
  }
  func.func @transform_0(%arg0: i32) -> (i32, i32) {
    %c0_i32 = arith.constant 0 : i32
    %c0_i32_0 = arith.constant 0 : i32
    return %arg0, %c0_i32 : i32, i32
  }
  func.func @transform_1(%arg0: i32) -> (i32, i32) {
    %c0_i32 = arith.constant 0 : i32
    %c0_i32_0 = arith.constant 0 : i32
    return %arg0, %c0_i32 : i32, i32
  }
}

</mosaic_0001>

<llo_original>
// kernel: tpu_custom_call.1
$region0: #{tpu_custom_call.1}
  #allocation0 [shape = 'u32[]', space=smem, size = 0x4, offset = 0x4, fixed_abs, tag = 'smem constant byte address 0x4 - core index']
  #allocation1 [shape = 'u32[144,128]{1,0:T(1,128)}', space=vmem, size = 0x12000, scoped, tag = 'internal scratch']
  %s0 = inlined_call_operand.hbm [shape: f32[8,256], index: 0, kind: input, shape index: {}]
  %s1 = inlined_call_operand.hbm [shape: f32[8,256], index: 1, kind: output, shape index: {}]
  %s2 = sld [smem:[#allocation0]]
  $region18: #{tpu_custom_call.1} parent=0
    _
  %s4 = ssub.s32 1, %s2
  %s5 = scalar_select 0, %s4, %s2
  $region1: #{tpu_custom_call.1} parent=0
    #allocation2 [shape = 'u8[8192]{0}', space=vmem, size = 0x2000, scoped, tag = 'input window, operand 0, single buffered']
    #allocation3 [shape = 's32[1]{0}', space=sflag, size = 0x4, scoped, tag = 'scoped memory for tpu_custom_call.1']
    #allocation4 [shape = 's32[1]{0}', space=sflag, size = 0x4, scoped, tag = 'scoped memory for tpu_custom_call.1']
    #allocation5 [shape = 'u8[8192]{0}', space=vmem, size = 0x2000, scoped, tag = 'output window, operand 0, single buffered']
    %6 = vsyncpa [#allocation3], 0
    %7 = vsyncpa [#allocation4], 0
    // Predicated region
    $region2: #{tpu_custom_call.1} parent=1 // pred_check
      _
    $region3: #{tpu_custom_call.1} parent=1 // pred_check_branch
      %9 = sbr.rel (0) target = $region5
    $region4: #{tpu_custom_call.1} parent=1 // pred_region
      %s11 = ssub.s32 256, 256
      %12 = vsyncadd [#allocation3], %s11
      %s14 = sshll.u32 [#allocation2], 4
      %s15 = int_to_ptr.vmem [resolvable:$true] %s14
      %17 = dma.hbm_to_vmem [thread:$0]  %s0, 256, %s15, [#allocation3]
    $region5: #{tpu_custom_call.1} parent=1 // pred_fallthru
      _
    // Predicated region
    $region6: #{tpu_custom_call.1} parent=1 // pred_check
      _
    $region7: #{tpu_custom_call.1} parent=1 // pred_check_branch
      %19 = sbr.rel (0) target = $region9
    $region8: #{tpu_custom_call.1} parent=1 // pred_region
      %20 = dma.done [#allocation3], 256
    $region9: #{tpu_custom_call.1} parent=1 // pred_fallthru
      _
    %v21 = vlaneseq
    %v22 = vand.u32 %v21, 127
    %v23 = vadd.s32 %v22, 128
    %vm24 = vcmp.lt.s32.totalorder %v22, 0
    %v25 = vsub.s32 0, %v22
    %v26 = vsel %vm24, %v25, %v22
    %v27 = vshrl.u32 %v26, 4
    %v28 = vand.u32 %v26, 15
    %v29 = vsub.s32 0, %v28
    %v30 = vsel %vm24, %v29, %v28
    %vm31 = vcmp.lt.s32.totalorder %v23, 0
    %v32 = vsub.s32 0, %v23
    %v33 = vsel %vm31, %v32, %v23
    %v34 = vshrl.u32 %v33, 4
    %v35 = vand.u32 %v33, 15
    %v36 = vsub.s32 0, %v35
    %v37 = vsel %vm31, %v36, %v35
    %vm38 = vcmp.ne.s32.totalorder %v30, 0
    %vm39 = vcmp.ne.s32.totalorder %v37, 0
    %vm40 = vcmp.lt.s32.totalorder %v30, 0
    %vm41 = vcmp.lt.s32.totalorder %v37, 0
    %vm42 = vmand %vm40, %vm38
    %vm43 = vmand %vm41, %vm39
    %v44 = vadd.s32 %v30, 16
    %v45 = vadd.s32 %v37, 16
    %v46 = vsel %vm42, %v44, %v30
    %v47 = vsel %vm43, %v45, %v37
    %s48 = smul.u32 0, 2
    %s49 = smul.addr %s48, 8
    %s50 = scalar_lea.vmem [#allocation2], %s49
    %v51 = vld [vmem:[%s50] sm:$0xff]
    %v52 = vld [vmem:[%s50 + $0x8] sm:$0xff]
    %v53 = vmul.f32 %v51, 0.3909913
    %v54 = vmul.f32 %v52, 0.3909913
    %55 = vrot.lane.b32.xlu0 %v51, 112
    %v56 = vpop.permute.xlu0 %55
    %57 = vrot.lane.b32.xlu0 %v52, 112
    %v58 = vpop.permute.xlu0 %57
    %vm59 = vcmp.lt.s32.totalorder %v22, 112
    %v60 = vsel %vm59, %v56, %v58
    %v61 = vsel %vm59, %v58, %v56
    %vm62 = vcmp.lt.s32.totalorder %v22, 240
    %vm63 = vcmp.lt.s32.totalorder %v23, 240
    %v64 = vsel %vm62, %v60, 0.0
    %v65 = vsel %vm63, %v61, 0.0
    %66 = vrot.lane.b32.xlu0 %v51, 16
    %v67 = vpop.permute.xlu0 %66
    %68 = vrot.lane.b32.xlu0 %v52, 16
    %v69 = vpop.permute.xlu0 %68
    %vm70 = vcmp.lt.s32.totalorder %v22, 16
    %v71 = vsel %vm70, %v67, %v69
    %v72 = vsel %vm70, %v69, %v67
    %vm73 = vcmp.ge.s32.totalorder %v22, 16
    %vm74 = vcmp.ge.s32.totalorder %v23, 16
    %v75 = vsel %vm73, %v72, 0.0
    %v76 = vsel %vm74, %v71, 0.0
    %v77 = vmul.f32 %v64, 0.30450433
    %v78 = vmul.f32 %v65, 0.30450433
    %v79 = vadd.f32 %v53, %v77
    %v80 = vadd.f32 %v54, %v78
    %v81 = vmul.f32 %v75, 0.30450433
    %v82 = vmul.f32 %v76, 0.30450433
    %v83 = vadd.f32 %v79, %v81
    %v84 = vadd.f32 %v80, %v82
    %v85 = vmul.f32 %v83, 0.3909913
    %v86 = vmul.f32 %v84, 0.3909913
    %87 = vrot.lane.b32.xlu0 %v83, 127
    %v88 = vpop.permute.xlu0 %87
    %89 = vrot.lane.b32.xlu0 %v84, 127
    %v90 = vpop.permute.xlu0 %89
    %vm91 = vcmp.lt.s32.totalorder %v22, 127
    %v92 = vsel %vm91, %v88, %v90
    %v93 = vsel %vm91, %v90, %v88
    %vm94 = vcmp.lt.s32.totalorder %v46, 15
    %vm95 = vcmp.lt.s32.totalorder %v47, 15
    %v96 = vsel %vm94, %v92, 0.0
    %v97 = vsel %vm95, %v93, 0.0
    %98 = vrot.lane.b32.xlu0 %v83, 1
    %v99 = vpop.permute.xlu0 %98
    %100 = vrot.lane.b32.xlu0 %v84, 1
    %v101 = vpop.permute.xlu0 %100
    %vm102 = vcmp.lt.s32.totalorder %v22, 1
    %v103 = vsel %vm102, %v99, %v101
    %v104 = vsel %vm102, %v101, %v99
    %vm105 = vcmp.ge.s32.totalorder %v46, 1
    %vm106 = vcmp.ge.s32.totalorder %v47, 1
    %v107 = vsel %vm105, %v104, 0.0
    %v108 = vsel %vm106, %v103, 0.0
    %v109 = vmul.f32 %v96, 0.30450433
    %v110 = vmul.f32 %v97, 0.30450433
    %v111 = vadd.f32 %v85, %v109
    %v112 = vadd.f32 %v86, %v110
    %v113 = vmul.f32 %v107, 0.30450433
    %v114 = vmul.f32 %v108, 0.30450433
    %v115 = vadd.f32 %v111, %v113
    %v116 = vadd.f32 %v112, %v114
    %s117 = smul.addr %s48, 8
    %s118 = scalar_lea.vmem [#allocation5], %s117
    %119 = vst [vmem:[%s118] sm:$0xff] %v115
    %120 = vst [vmem:[%s118 + $0x8] sm:$0xff] %v116
    // Predicated region
    $region10: #{tpu_custom_call.1} parent=1 // pred_check
      _
    $region11: #{tpu_custom_call.1} parent=1 // pred_check_branch
      %122 = sbr.rel (0) target = $region13
    $region12: #{tpu_custom_call.1} parent=1 // pred_region
      %s124 = ssub.s32 256, 256
      %125 = vsyncadd [#allocation4], %s124
      %s127 = sshll.u32 [#allocation5], 4
      %s128 = int_to_ptr.vmem [resolvable:$true] %s127
      %130 = dma.vmem_to_hbm [thread:$0]  %s128, 256, %s1, [#allocation4]
    $region13: #{tpu_custom_call.1} parent=1 // pred_fallthru
      _
    // Predicated region
    $region14: #{tpu_custom_call.1} parent=1 // pred_check
      _
    $region15: #{tpu_custom_call.1} parent=1 // pred_check_branch
      %132 = sbr.rel (0) target = $region17
    $region16: #{tpu_custom_call.1} parent=1 // pred_region
      %133 = dma.done [#allocation4], 256
    $region17: #{tpu_custom_call.1} parent=1 // pred_fallthru
      _
    %134 = vsyncpa [#allocation3], 1
    %135 = vsyncpa [#allocation4], 1

</llo_original>
